<compile_context>
chip_gen: v7x
topology: tpu7x:2x2x1
jax: 0.10.0
libtpu: 0.0.40
codegen_flags: <defaults>
</compile_context>

<pallas_src>
import functools

import jax
import jax.numpy as jnp
from jax import lax
from jax.experimental import pallas as pl
from jax.experimental.pallas import tpu as pltpu


_MAX_TILE = 2048          # rows / lanes per block: roofline is flat past ~1-2K
_LANES = 128              # vreg lane width


def _round_up(x, m):
    return ((x + m - 1) // m) * m


@functools.lru_cache(maxsize=None)
def _hw_params():
    """(vmem_limit_bytes, tile_budget_bytes, num_tensorcores).

    Derived from the chip when available; conservative (v7x-safe) fallbacks
    otherwise.  A 32 MiB scoped-VMEM cap is safe on every generation (v5e/v6e
    have 128 MiB, v7x 64 MiB per TC) and costs <=1-2% of roofline vs. bigger
    tiles (measured tiling curve is flat past ~512-wide blocks).
    """
    vmem_cap = None
    cores = None
    try:
        info = pltpu.get_tpu_info()
        cap = getattr(info, "vmem_capacity_bytes", None)
        if isinstance(cap, int) and cap > 0:
            vmem_cap = cap
        for attr in ("num_cores", "tensorcore_count", "num_tensorcores", "core_count"):
            val = getattr(info, attr, None)
            if isinstance(val, int) and val > 0:
                cores = val
                break
    except Exception:
        pass
    if vmem_cap is None:
        vmem_cap = 64 << 20                       # assume the smallest (v7x per-TC)
    if cores is None:
        try:
            dev_cores = getattr(jax.devices()[0], "num_cores", None)
            cores = int(dev_cores) if dev_cores else 1
        except Exception:
            cores = 1
    cores = max(1, int(cores))
    limit = min(32 << 20, vmem_cap // 2)
    budget = max(2 << 20, limit // 2)             # double-buffered tiles + f32 temps
    return int(limit), int(budget), cores


@functools.lru_cache(maxsize=None)
def _roll_is_like_jnp():
    """Probe pltpu.roll's rotation direction once (tiny one-off kernel).

    Returns True  if pltpu.roll(x, s, axis)[j] == x[j - s]  (jnp.roll convention),
            False if the direction is flipped,
            None  if the probe fails (lane-packed path is then disabled).
    """
    try:
        def probe(o_ref):
            lane = lax.broadcasted_iota(jnp.float32, (8, _LANES), 1)
            o_ref[...] = pltpu.roll(lane, 1, axis=1)

        out = pl.pallas_call(
            probe, out_shape=jax.ShapeDtypeStruct((8, _LANES), jnp.float32))()
        v = float(jax.device_get(out)[0, 0])
        if v == float(_LANES - 1):
            return True
        if v == 1.0:
            return False
    except Exception:
        pass
    return None


def _pick_row_tile(n_rows, bytes_per_row, budget, cores):
    """Rows per block (multiple of 8) for a (rows, lanes) layout."""
    tm = max(8, min(_MAX_TILE, budget // max(1, bytes_per_row)))
    tm = max(8, (tm // 8) * 8)
    if cores >= 2 and n_rows > 16:
        # Guarantee >= 2 grid steps (a multiple of the TC count) on multi-core
        # chips; single-TC chips keep the full tile (halving only adds step
        # overhead there).
        steps = _round_up(max(cores, pl.cdiv(n_rows, tm)), cores)
        tm = min(tm, max(8, _round_up(pl.cdiv(n_rows, steps), 8)))
    return min(tm, _round_up(n_rows, 8))


# --------------------------------- kernels ----------------------------------

def _ln_lastdim_kernel(x_ref, w_ref, b_ref, o_ref, *, eps, inv_c):
    # x_ref: (tm, C); w_ref/b_ref: (1, C).  Normalize over the lane (C) axis.
    x = x_ref[...].astype(jnp.float32)
    mean = jnp.sum(x, axis=-1, keepdims=True) * inv_c
    xc = x - mean
    var = jnp.sum(xc * xc, axis=-1, keepdims=True) * inv_c   # biased variance
    inv = lax.rsqrt(var + eps)
    w = w_ref[...].astype(jnp.float32)
    b = b_ref[...].astype(jnp.float32)
    o_ref[...] = (xc * inv * w + b).astype(o_ref.dtype)


def _ln_packed_kernel(x_ref, w_ref, b_ref, o_ref, *, eps, inv_c, c, roll_like_jnp):
    # x_ref/o_ref: (tm, 128) where every 128-lane row packs k = 128//c logical
    # rows of c channels (lane-dense view of an (R, c) slab).
    # w_ref/b_ref: (1, 128) = per-channel affine params tiled k times.
    x = x_ref[...].astype(jnp.float32)
    lane = lax.broadcasted_iota(jnp.int32, (1, _LANES), 1)

    def up(v, s):     # up(v, s)[j]   = v[(j + s) mod 128]
        return pltpu.roll(v, (_LANES - s) if roll_like_jnp else s, axis=1)

    def down(v, s):   # down(v, s)[j] = v[(j - s) mod 128]
        return pltpu.roll(v, s if roll_like_jnp else (_LANES - s), axis=1)

    def seg_sum(v):
        # XOR butterfly over each aligned c-wide lane group: after log2(c)
        # rounds every lane holds its own group's sum (reduce + broadcast in
        # one pass).  Rolls ride the otherwise-idle XLU slot.
        s = 1
        while s < c:
            v = v + jnp.where((lane & s) == 0, up(v, s), down(v, s))
            s *= 2
        return v

    mean = seg_sum(x) * inv_c
    xc = x - mean
    var = seg_sum(xc * xc) * inv_c
    inv = lax.rsqrt(var + eps)
    o_ref[...] = (xc * inv * w_ref[...] + b_ref[...]).astype(o_ref.dtype)


def _ln_channels_first_kernel(x_ref, w_ref, b_ref, o_ref, *, eps, inv_c):
    # x_ref/o_ref: (bt, C, HW); w_ref/b_ref: (1, C, 1).  Normalize over the
    # sublane (C) axis; HW stays lane-dense.  One loop step per folded batch.
    w = w_ref[0].astype(jnp.float32)                  # (C, 1) broadcasts over lanes
    b = b_ref[0].astype(jnp.float32)

    def body(i, carry):
        x = x_ref[i].astype(jnp.float32)              # (C, HW)
        mean = jnp.sum(x, axis=0, keepdims=True) * inv_c
        xc = x - mean
        var = jnp.sum(xc * xc, axis=0, keepdims=True) * inv_c
        o_ref[i] = (xc * lax.rsqrt(var + eps) * w + b).astype(o_ref.dtype)
        return carry

    lax.fori_loop(0, x_ref.shape[0], body, 0)


# --------------------------------- wrappers ---------------------------------

def _layer_norm_lastdim(x2d, weight, bias, eps):
    """LayerNorm over the last dim of an (R, C) array."""
    limit, budget, cores = _hw_params()
    R, C = x2d.shape
    itemsize = jnp.dtype(x2d.dtype).itemsize

    # ---- lane-packed fast path for small power-of-two C --------------------
    if 1 <= C <= 64 and (C & (C - 1)) == 0 and R > 0:
        k = _LANES // C
        if R % k == 0:
            roll_conv = _roll_is_like_jnp()
            if roll_conv is not None:
                r2 = R // k
                xp = x2d.reshape(r2, _LANES)                      # free row-major view
                wp = jnp.tile(weight.astype(jnp.float32), k).reshape(1, _LANES)
                bp = jnp.tile(bias.astype(jnp.float32), k).reshape(1, _LANES)
                per_row = _LANES * (4 * itemsize + 16) + 64
                tm = _pick_row_tile(r2, per_row, budget, cores)
                yp = pl.pallas_call(
                    functools.partial(_ln_packed_kernel, eps=float(eps),
                                      inv_c=1.0 / C, c=C,
                                      roll_like_jnp=bool(roll_conv)),
                    out_shape=jax.ShapeDtypeStruct((r2, _LANES), x2d.dtype),
                    grid_spec=pltpu.PrefetchScalarGridSpec(
                        num_scalar_prefetch=0,
                        grid=(pl.cdiv(r2, tm),),
                        in_specs=[
                            pl.BlockSpec((tm, _LANES), lambda i: (i, 0)),
                            pl.BlockSpec((1, _LANES), lambda i: (0, 0)),
                            pl.BlockSpec((1, _LANES), lambda i: (0, 0)),
                        ],
                        out_specs=pl.BlockSpec((tm, _LANES), lambda i: (i, 0)),
                    ),
                    compiler_params=pltpu.CompilerParams(
                        dimension_semantics=("parallel",),
                        vmem_limit_bytes=limit),
                )(xp, wp, bp)
                return yp.reshape(R, C)

    # ---- plain path: (tm, C) row tiles --------------------------------------
    per_row = C * (4 * itemsize + 12) + 64
    tm = _pick_row_tile(R, per_row, budget, cores)
    w2 = weight.astype(jnp.float32).reshape(1, C)
    b2 = bias.astype(jnp.float32).reshape(1, C)
    return pl.pallas_call(
        functools.partial(_ln_lastdim_kernel, eps=float(eps), inv_c=1.0 / C),
        out_shape=jax.ShapeDtypeStruct((R, C), x2d.dtype),
        grid_spec=pltpu.PrefetchScalarGridSpec(
            num_scalar_prefetch=0,
            grid=(pl.cdiv(R, tm),),
            in_specs=[
                pl.BlockSpec((tm, C), lambda i: (i, 0)),
                pl.BlockSpec((1, C), lambda i: (0, 0)),
                pl.BlockSpec((1, C), lambda i: (0, 0)),
            ],
            out_specs=pl.BlockSpec((tm, C), lambda i: (i, 0)),
        ),
        compiler_params=pltpu.CompilerParams(
            dimension_semantics=("parallel",), vmem_limit_bytes=limit),
    )(x2d, w2, b2)


def _layer_norm_channels_first(x, weight, bias, eps):
    """LayerNorm over dim 1 of an NCHW tensor, run natively (no transposes)."""
    limit, budget, cores = _hw_params()
    B, C, H, W = x.shape
    HW = H * W
    x3 = x.reshape(B, C, HW)                          # free view: merge trailing dims
    itemsize = jnp.dtype(x.dtype).itemsize
    w3 = weight.astype(jnp.float32).reshape(1, C, 1)
    b3 = bias.astype(jnp.float32).reshape(1, C, 1)
    kern = functools.partial(_ln_channels_first_kernel, eps=float(eps), inv_c=1.0 / C)

    per_batch = C * HW * (4 * itemsize + 12) + 256
    fold = per_batch <= budget
    if fold and cores >= 2 and B < cores and HW >= 2 * _LANES:
        fold = False                # too few batches to feed every TC: tile HW instead

    if fold:
        # Fold whole batch elements into one block: contiguous C*HW DMAs and far
        # fewer grid steps (amortizes the ~0.35us per-step overhead for small HW).
        bt = max(1, min(B, budget // per_batch, 256))
        if cores >= 2 and B > 1:
            steps = _round_up(max(cores, pl.cdiv(B, bt)), cores)
            bt = max(1, min(bt, pl.cdiv(B, steps)))
        y3 = pl.pallas_call(
            kern,
            out_shape=jax.ShapeDtypeStruct((B, C, HW), x.dtype),
            grid_spec=pltpu.PrefetchScalarGridSpec(
                num_scalar_prefetch=0,
                grid=(pl.cdiv(B, bt),),
                in_specs=[
                    pl.BlockSpec((bt, C, HW), lambda i: (i, 0, 0)),
                    pl.BlockSpec((1, C, 1), lambda i: (0, 0, 0)),
                    pl.BlockSpec((1, C, 1), lambda i: (0, 0, 0)),
                ],
                out_specs=pl.BlockSpec((bt, C, HW), lambda i: (i, 0, 0)),
            ),
            compiler_params=pltpu.CompilerParams(
                dimension_semantics=("parallel",), vmem_limit_bytes=limit),
        )(x3, w3, b3)
    else:
        # Tile the spatial (lane) axis; one batch element per step.
        per_col = C * (4 * itemsize + 12) + 64
        tl = max(_LANES, min(_MAX_TILE, budget // max(1, per_col)))
        tl = max(_LANES, (tl // _LANES) * _LANES)
        if cores >= 2 and B < cores:
            tl = min(tl, max(_LANES, _round_up(pl.cdiv(HW, cores), _LANES)))
        if tl >= HW:
            tl = HW                                   # single full-width block
        y3 = pl.pallas_call(
            kern,
            out_shape=jax.ShapeDtypeStruct((B, C, HW), x.dtype),
            grid_spec=pltpu.PrefetchScalarGridSpec(
                num_scalar_prefetch=0,
                grid=(B, pl.cdiv(HW, tl)),
                in_specs=[
                    pl.BlockSpec((1, C, tl), lambda bi, ti: (bi, 0, ti)),
                    pl.BlockSpec((1, C, 1), lambda bi, ti: (0, 0, 0)),
                    pl.BlockSpec((1, C, 1), lambda bi, ti: (0, 0, 0)),
                ],
                out_specs=pl.BlockSpec((1, C, tl), lambda bi, ti: (bi, 0, ti)),
            ),
            compiler_params=pltpu.CompilerParams(
                dimension_semantics=("parallel", "parallel"),
                vmem_limit_bytes=limit),
        )(x3, w3, b3)
    return y3.reshape(B, C, H, W)


class LayerNormPallas:
    """Forward-only Pallas mirror of the PyTorch ConvNeXt LayerNorm module."""

    def __init__(self, normalized_shape, eps=1e-6, data_format="channels_last"):
        if data_format not in ("channels_last", "channels_first"):
            raise NotImplementedError
        if isinstance(normalized_shape, (tuple, list)):
            if len(normalized_shape) != 1:
                raise NotImplementedError   # only LN over a single trailing dim
            normalized_shape = normalized_shape[0]
        c = int(normalized_shape)
        self.eps = float(eps)
        self.data_format = data_format
        self.normalized_shape = (c,)
        # PyTorch default parameter init: weight = ones, bias = zeros.
        self.weight = jnp.ones((c,), jnp.float32)
        self.bias = jnp.zeros((c,), jnp.float32)

    def __call__(self, x):
        c = self.normalized_shape[0]
        if self.data_format == "channels_last":
            assert x.shape[-1] == c
            lead = x.shape[:-1]
            y = _layer_norm_lastdim(x.reshape(-1, c), self.weight, self.bias, self.eps)
            return y.reshape(*lead, c)
        else:  # channels_first: NCHW, normalize over dim 1
            assert x.ndim == 4 and x.shape[1] == c
            return _layer_norm_channels_first(x, self.weight, self.bias, self.eps)


# ----------------------------- references & test -----------------------------

def _ref_channels_last(x, w, b, eps):
    mean = jnp.mean(x, axis=-1, keepdims=True)
    var = jnp.mean((x - mean) ** 2, axis=-1, keepdims=True)
    return (x - mean) / jnp.sqrt(var + eps) * w + b


def _ref_channels_first(x, w, b, eps):
    u = jnp.mean(x, axis=1, keepdims=True)
    s = jnp.mean((x - u) ** 2, axis=1, keepdims=True)
    xn = (x - u) / jnp.sqrt(s + eps)
    return w[None, :, None, None] * xn + b[None, :, None, None]


if __name__ == "__main__":
    key = jax.random.PRNGKey(0)
    k1, k2, k3, k4, kw, kb = jax.random.split(key, 6)
    C = 4
    eps = 1e-6

    # Non-trivial affine parameters so the scale/shift path is exercised.
    weight = 1.0 + 0.1 * jax.random.normal(kw, (C,), jnp.float32)
    bias = 0.1 * jax.random.normal(kb, (C,), jnp.float32)

    # channels_last: (B, H, W, C) -> lane-packed fast path (R % (128//C) == 0)
    ln_last = LayerNormPallas(C, eps=eps, data_format="channels_last")
    ln_last.weight, ln_last.bias = weight, bias
    x_last = jax.random.normal(k1, (2, 16, 16, C), jnp.float32)
    y = jax.block_until_ready(ln_last(x_last))
    y_ref = _ref_channels_last(x_last, weight, bias, eps)
    assert jnp.max(jnp.abs(y - y_ref)) < 1e-4

    # channels_last with a ragged row count -> plain (tm, C) path, masked edges
    x_rag = jax.random.normal(k3, (3, 5, 7, C), jnp.float32)
    y = jax.block_until_ready(ln_last(x_rag))
    y_ref = _ref_channels_last(x_rag, weight, bias, eps)
    assert jnp.max(jnp.abs(y - y_ref)) < 1e-4

    # channels_first: (B, C, H, W), native NCHW kernel (batch-folded blocks)
    ln_first = LayerNormPallas(C, eps=eps, data_format="channels_first")
    ln_first.weight, ln_first.bias = weight, bias
    x_first = jax.random.normal(k2, (2, C, 16, 16), jnp.float32)
    y = jax.block_until_ready(ln_first(x_first))
    y_ref = _ref_channels_first(x_first, weight, bias, eps)
    assert jnp.max(jnp.abs(y - y_ref)) < 1e-4

    # channels_first with a non-multiple-of-128 spatial extent
    x_first_rag = jax.random.normal(k4, (1, C, 20, 20), jnp.float32)
    y = jax.block_until_ready(ln_first(x_first_rag))
    y_ref = _ref_channels_first(x_first_rag, weight, bias, eps)
    assert jnp.max(jnp.abs(y - y_ref)) < 1e-4

    print("KERNEL_OK")
</pallas_src>

<mosaic_0001>
module attributes {stable_mosaic.version = 11 : i64} {
  func.func @_ln_lastdim_kernel(%arg0: i32, %arg1: memref<512x4xf32, #tpu.memory_space<vmem>>, %arg2: memref<1x4xf32, #tpu.memory_space<vmem>>, %arg3: memref<1x4xf32, #tpu.memory_space<vmem>>, %arg4: memref<512x4xf32, #tpu.memory_space<vmem>>) attributes {dimension_semantics = [#tpu.dimension_semantics<parallel>], iteration_bounds = array<i64: 1>, scalar_prefetch = 0 : i64, scratch_operands = 0 : i64, tpu.core_type = #tpu.core_type<tc>, window_params = [{transform_indices = @transform_0, window_bounds = array<i64: 512, 4>}, {pipeline_mode = #tpu.pipeline_mode<synchronous>, transform_indices = @transform_1, window_bounds = array<i64: 1, 4>}, {pipeline_mode = #tpu.pipeline_mode<synchronous>, transform_indices = @transform_2, window_bounds = array<i64: 1, 4>}, {transform_indices = @transform_3, window_bounds = array<i64: 512, 4>}]} {
    %c0 = arith.constant 0 : index
    %c0_0 = arith.constant 0 : index
    %0 = vector.load %arg1[%c0, %c0_0] : memref<512x4xf32, #tpu.memory_space<vmem>>, vector<512x4xf32>
    %cst = arith.constant dense<0.000000e+00> : vector<512xf32>
    %1 = vector.multi_reduction <add>, %0, %cst [1] : vector<512x4xf32> to vector<512xf32>
    %2 = vector.shape_cast %1 : vector<512xf32> to vector<512x1xf32>
    %cst_1 = arith.constant 2.500000e-01 : f32
    %3 = vector.broadcast %cst_1 : f32 to vector<512x1xf32>
    %4 = arith.mulf %2, %3 : vector<512x1xf32>
    %5 = vector.broadcast %4 : vector<512x1xf32> to vector<512x4xf32>
    %6 = arith.subf %0, %5 : vector<512x4xf32>
    %7 = arith.mulf %6, %6 : vector<512x4xf32>
    %cst_2 = arith.constant dense<0.000000e+00> : vector<512xf32>
    %8 = vector.multi_reduction <add>, %7, %cst_2 [1] : vector<512x4xf32> to vector<512xf32>
    %9 = vector.shape_cast %8 : vector<512xf32> to vector<512x1xf32>
    %cst_3 = arith.constant 2.500000e-01 : f32
    %10 = vector.broadcast %cst_3 : f32 to vector<512x1xf32>
    %11 = arith.mulf %9, %10 : vector<512x1xf32>
    %cst_4 = arith.constant 9.99999997E-7 : f32
    %12 = vector.broadcast %cst_4 : f32 to vector<512x1xf32>
    %13 = arith.addf %11, %12 : vector<512x1xf32>
    %14 = math.rsqrt %13 : vector<512x1xf32>
    %c0_5 = arith.constant 0 : index
    %c0_6 = arith.constant 0 : index
    %15 = vector.load %arg2[%c0_5, %c0_6] : memref<1x4xf32, #tpu.memory_space<vmem>>, vector<1x4xf32>
    %c0_7 = arith.constant 0 : index
    %c0_8 = arith.constant 0 : index
    %16 = vector.load %arg3[%c0_7, %c0_8] : memref<1x4xf32, #tpu.memory_space<vmem>>, vector<1x4xf32>
    %17 = vector.broadcast %14 : vector<512x1xf32> to vector<512x4xf32>
    %18 = arith.mulf %6, %17 : vector<512x4xf32>
    %19 = vector.broadcast %15 : vector<1x4xf32> to vector<512x4xf32>
    %20 = arith.mulf %18, %19 : vector<512x4xf32>
    %21 = vector.broadcast %16 : vector<1x4xf32> to vector<512x4xf32>
    %22 = arith.addf %20, %21 : vector<512x4xf32>
    %c0_9 = arith.constant 0 : index
    %c0_10 = arith.constant 0 : index
    %23 = vector.load %arg4[%c0_9, %c0_10] : memref<512x4xf32, #tpu.memory_space<vmem>>, vector<512x4xf32>
    tpu.vector_store %arg4[%c0_9, %c0_10], %22 {strides = array<i32>} : memref<512x4xf32, #tpu.memory_space<vmem>>, vector<512x4xf32>,
    return
  }
  func.func @transform_0(%arg0: i32) -> (i32, i32) {
    %c0_i32 = arith.constant 0 : i32
    %c0_i32_0 = arith.constant 0 : i32
    return %arg0, %c0_i32 : i32, i32
  }
  func.func @transform_1(%arg0: i32) -> (i32, i32) {
    %c0_i32 = arith.constant 0 : i32
    %c0_i32_0 = arith.constant 0 : i32
    %c0_i32_1 = arith.constant 0 : i32
    return %c0_i32, %c0_i32_0 : i32, i32
  }
  func.func @transform_2(%arg0: i32) -> (i32, i32) {
    %c0_i32 = arith.constant 0 : i32
    %c0_i32_0 = arith.constant 0 : i32
    %c0_i32_1 = arith.constant 0 : i32
    return %c0_i32, %c0_i32_0 : i32, i32
  }
  func.func @transform_3(%arg0: i32) -> (i32, i32) {
    %c0_i32 = arith.constant 0 : i32
    %c0_i32_0 = arith.constant 0 : i32
    return %arg0, %c0_i32 : i32, i32
  }
}

</mosaic_0001>

<llo_original>
// kernel: tpu_custom_call.1
$region0: #{tpu_custom_call.1}
  #allocation0 [shape = 'u32[]', space=smem, size = 0x4, offset = 0x4, fixed_abs, tag = 'smem constant byte address 0x4 - core index']
  #allocation1 [shape = 'u32[144,128]{1,0:T(1,128)}', space=vmem, size = 0x12000, scoped, tag = 'internal scratch']
  %s0 = inlined_call_operand.vmem [shape: f32[512,4], index: 0, kind: input, shape index: {}]
  %s1 = inlined_call_operand.vmem [shape: f32[1,4], index: 1, kind: input, shape index: {}]
  %s2 = inlined_call_operand.vmem [shape: f32[1,4], index: 2, kind: input, shape index: {}]
  %s3 = inlined_call_operand.vmem [shape: f32[512,4], index: 3, kind: output, shape index: {}]
  %s4 = sld [smem:[#allocation0]]
  $region22: #{tpu_custom_call.1} parent=0
    _
  %s6 = ssub.s32 1, %s4
  %s7 = scalar_select 0, %s6, %s4
  // Predicated region
  $region2: #{tpu_custom_call.1} parent=0 // pred_check
    _
  $region3: #{tpu_custom_call.1} parent=0 // pred_check_branch
    %9 = sbr.rel (0) target = $region5
  $region4: #{tpu_custom_call.1} parent=0 // pred_region
    _
  $region5: #{tpu_custom_call.1} parent=0 // pred_fallthru
    _
  // Predicated region
  $region6: #{tpu_custom_call.1} parent=0 // pred_check
    _
  $region7: #{tpu_custom_call.1} parent=0 // pred_check_branch
    %11 = sbr.rel (0) target = $region9
  $region8: #{tpu_custom_call.1} parent=0 // pred_region
    _
  $region9: #{tpu_custom_call.1} parent=0 // pred_fallthru
    _
  // Predicated region
  $region10: #{tpu_custom_call.1} parent=0 // pred_check
    _
  $region11: #{tpu_custom_call.1} parent=0 // pred_check_branch
    %13 = sbr.rel (0) target = $region13
  $region12: #{tpu_custom_call.1} parent=0 // pred_region
    _
  $region13: #{tpu_custom_call.1} parent=0 // pred_fallthru
    _
  %v14 = vld [vmem:[%s0] sm:$0xff]
  %v15 = vld [vmem:[%s0 + $0x8] sm:$0xff]
  %v16 = vld [vmem:[%s0 + $0x10] sm:$0xff]
  %v17 = vld [vmem:[%s0 + $0x18] sm:$0xff]
  %v18 = vld [vmem:[%s0 + $0x20] sm:$0xff]
  %v19 = vld [vmem:[%s0 + $0x28] sm:$0xff]
  %v20 = vld [vmem:[%s0 + $0x30] sm:$0xff]
  %v21 = vld [vmem:[%s0 + $0x38] sm:$0xff]
  %v22 = vld [vmem:[%s0 + $0x40] sm:$0xff]
  %v23 = vld [vmem:[%s0 + $0x48] sm:$0xff]
  %v24 = vld [vmem:[%s0 + $0x50] sm:$0xff]
  %v25 = vld [vmem:[%s0 + $0x58] sm:$0xff]
  %v26 = vld [vmem:[%s0 + $0x60] sm:$0xff]
  %v27 = vld [vmem:[%s0 + $0x68] sm:$0xff]
  %v28 = vld [vmem:[%s0 + $0x70] sm:$0xff]
  %v29 = vld [vmem:[%s0 + $0x78] sm:$0xff]
  %v30 = vld [vmem:[%s0 + $0x80] sm:$0xff]
  %v31 = vld [vmem:[%s0 + $0x88] sm:$0xff]
  %v32 = vld [vmem:[%s0 + $0x90] sm:$0xff]
  %v33 = vld [vmem:[%s0 + $0x98] sm:$0xff]
  %v34 = vld [vmem:[%s0 + $0xa0] sm:$0xff]
  %v35 = vld [vmem:[%s0 + $0xa8] sm:$0xff]
  %v36 = vld [vmem:[%s0 + $0xb0] sm:$0xff]
  %v37 = vld [vmem:[%s0 + $0xb8] sm:$0xff]
  %v38 = vld [vmem:[%s0 + $0xc0] sm:$0xff]
  %v39 = vld [vmem:[%s0 + $0xc8] sm:$0xff]
  %v40 = vld [vmem:[%s0 + $0xd0] sm:$0xff]
  %v41 = vld [vmem:[%s0 + $0xd8] sm:$0xff]
  %v42 = vld [vmem:[%s0 + $0xe0] sm:$0xff]
  %v43 = vld [vmem:[%s0 + $0xe8] sm:$0xff]
  %v44 = vld [vmem:[%s0 + $0xf0] sm:$0xff]
  %v45 = vld [vmem:[%s0 + $0xf8] sm:$0xff]
  %v46 = vld [vmem:[%s0 + $0x100] sm:$0xff]
  %v47 = vld [vmem:[%s0 + $0x108] sm:$0xff]
  %v48 = vld [vmem:[%s0 + $0x110] sm:$0xff]
  %v49 = vld [vmem:[%s0 + $0x118] sm:$0xff]
  %v50 = vld [vmem:[%s0 + $0x120] sm:$0xff]
  %v51 = vld [vmem:[%s0 + $0x128] sm:$0xff]
  %v52 = vld [vmem:[%s0 + $0x130] sm:$0xff]
  %v53 = vld [vmem:[%s0 + $0x138] sm:$0xff]
  %v54 = vld [vmem:[%s0 + $0x140] sm:$0xff]
  %v55 = vld [vmem:[%s0 + $0x148] sm:$0xff]
  %v56 = vld [vmem:[%s0 + $0x150] sm:$0xff]
  %v57 = vld [vmem:[%s0 + $0x158] sm:$0xff]
  %v58 = vld [vmem:[%s0 + $0x160] sm:$0xff]
  %v59 = vld [vmem:[%s0 + $0x168] sm:$0xff]
  %v60 = vld [vmem:[%s0 + $0x170] sm:$0xff]
  %v61 = vld [vmem:[%s0 + $0x178] sm:$0xff]
  %v62 = vld [vmem:[%s0 + $0x180] sm:$0xff]
  %v63 = vld [vmem:[%s0 + $0x188] sm:$0xff]
  %v64 = vld [vmem:[%s0 + $0x190] sm:$0xff]
  %v65 = vld [vmem:[%s0 + $0x198] sm:$0xff]
  %v66 = vld [vmem:[%s0 + $0x1a0] sm:$0xff]
  %v67 = vld [vmem:[%s0 + $0x1a8] sm:$0xff]
  %v68 = vld [vmem:[%s0 + $0x1b0] sm:$0xff]
  %v69 = vld [vmem:[%s0 + $0x1b8] sm:$0xff]
  %v70 = vld [vmem:[%s0 + $0x1c0] sm:$0xff]
  %v71 = vld [vmem:[%s0 + $0x1c8] sm:$0xff]
  %v72 = vld [vmem:[%s0 + $0x1d0] sm:$0xff]
  %v73 = vld [vmem:[%s0 + $0x1d8] sm:$0xff]
  %v74 = vld [vmem:[%s0 + $0x1e0] sm:$0xff]
  %v75 = vld [vmem:[%s0 + $0x1e8] sm:$0xff]
  %v76 = vld [vmem:[%s0 + $0x1f0] sm:$0xff]
  %v77 = vld [vmem:[%s0 + $0x1f8] sm:$0xff]
  %vm78 = vcmask 31744
  %v79 = vsel %vm78, %v14, 0.0
  %80 = vadd.xlane.f32.xlu0 %v79
  %v81 = vpop.xlane.xlu0 %80
  %v82 = vsel %vm78, %v15, 0.0
  %83 = vadd.xlane.f32.xlu0 %v82
  %v84 = vpop.xlane.xlu0 %83
  %v85 = vsel %vm78, %v16, 0.0
  %86 = vadd.xlane.f32.xlu0 %v85
  %v87 = vpop.xlane.xlu0 %86
  %v88 = vsel %vm78, %v17, 0.0
  %89 = vadd.xlane.f32.xlu0 %v88
  %v90 = vpop.xlane.xlu0 %89
  %v91 = vsel %vm78, %v18, 0.0
  %92 = vadd.xlane.f32.xlu0 %v91
  %v93 = vpop.xlane.xlu0 %92
  %v94 = vsel %vm78, %v19, 0.0
  %95 = vadd.xlane.f32.xlu0 %v94
  %v96 = vpop.xlane.xlu0 %95
  %v97 = vsel %vm78, %v20, 0.0
  %98 = vadd.xlane.f32.xlu0 %v97
  %v99 = vpop.xlane.xlu0 %98
  %v100 = vsel %vm78, %v21, 0.0
  %101 = vadd.xlane.f32.xlu0 %v100
  %v102 = vpop.xlane.xlu0 %101
  %v103 = vsel %vm78, %v22, 0.0
  %104 = vadd.xlane.f32.xlu0 %v103
  %v105 = vpop.xlane.xlu0 %104
  %v106 = vsel %vm78, %v23, 0.0
  %107 = vadd.xlane.f32.xlu0 %v106
  %v108 = vpop.xlane.xlu0 %107
  %v109 = vsel %vm78, %v24, 0.0
  %110 = vadd.xlane.f32.xlu0 %v109
  %v111 = vpop.xlane.xlu0 %110
  %v112 = vsel %vm78, %v25, 0.0
  %113 = vadd.xlane.f32.xlu0 %v112
  %v114 = vpop.xlane.xlu0 %113
  %v115 = vsel %vm78, %v26, 0.0
  %116 = vadd.xlane.f32.xlu0 %v115
  %v117 = vpop.xlane.xlu0 %116
  %v118 = vsel %vm78, %v27, 0.0
  %119 = vadd.xlane.f32.xlu0 %v118
  %v120 = vpop.xlane.xlu0 %119
  %v121 = vsel %vm78, %v28, 0.0
  %122 = vadd.xlane.f32.xlu0 %v121
  %v123 = vpop.xlane.xlu0 %122
  %v124 = vsel %vm78, %v29, 0.0
  %125 = vadd.xlane.f32.xlu0 %v124
  %v126 = vpop.xlane.xlu0 %125
  %v127 = vsel %vm78, %v30, 0.0
  %128 = vadd.xlane.f32.xlu0 %v127
  %v129 = vpop.xlane.xlu0 %128
  %v130 = vsel %vm78, %v31, 0.0
  %131 = vadd.xlane.f32.xlu0 %v130
  %v132 = vpop.xlane.xlu0 %131
  %v133 = vsel %vm78, %v32, 0.0
  %134 = vadd.xlane.f32.xlu0 %v133
  %v135 = vpop.xlane.xlu0 %134
  %v136 = vsel %vm78, %v33, 0.0
  %137 = vadd.xlane.f32.xlu0 %v136
  %v138 = vpop.xlane.xlu0 %137
  %v139 = vsel %vm78, %v34, 0.0
  %140 = vadd.xlane.f32.xlu0 %v139
  %v141 = vpop.xlane.xlu0 %140
  %v142 = vsel %vm78, %v35, 0.0
  %143 = vadd.xlane.f32.xlu0 %v142
  %v144 = vpop.xlane.xlu0 %143
  %v145 = vsel %vm78, %v36, 0.0
  %146 = vadd.xlane.f32.xlu0 %v145
  %v147 = vpop.xlane.xlu0 %146
  %v148 = vsel %vm78, %v37, 0.0
  %149 = vadd.xlane.f32.xlu0 %v148
  %v150 = vpop.xlane.xlu0 %149
  %v151 = vsel %vm78, %v38, 0.0
  %152 = vadd.xlane.f32.xlu0 %v151
  %v153 = vpop.xlane.xlu0 %152
  %v154 = vsel %vm78, %v39, 0.0
  %155 = vadd.xlane.f32.xlu0 %v154
  %v156 = vpop.xlane.xlu0 %155
  %v157 = vsel %vm78, %v40, 0.0
  %158 = vadd.xlane.f32.xlu0 %v157
  %v159 = vpop.xlane.xlu0 %158
  %v160 = vsel %vm78, %v41, 0.0
  %161 = vadd.xlane.f32.xlu0 %v160
  %v162 = vpop.xlane.xlu0 %161
  %v163 = vsel %vm78, %v42, 0.0
  %164 = vadd.xlane.f32.xlu0 %v163
  %v165 = vpop.xlane.xlu0 %164
  %v166 = vsel %vm78, %v43, 0.0
  %167 = vadd.xlane.f32.xlu0 %v166
  %v168 = vpop.xlane.xlu0 %167
  %v169 = vsel %vm78, %v44, 0.0
  %170 = vadd.xlane.f32.xlu0 %v169
  %v171 = vpop.xlane.xlu0 %170
  %v172 = vsel %vm78, %v45, 0.0
  %173 = vadd.xlane.f32.xlu0 %v172
  %v174 = vpop.xlane.xlu0 %173
  %v175 = vsel %vm78, %v46, 0.0
  %176 = vadd.xlane.f32.xlu0 %v175
  %v177 = vpop.xlane.xlu0 %176
  %v178 = vsel %vm78, %v47, 0.0
  %179 = vadd.xlane.f32.xlu0 %v178
  %v180 = vpop.xlane.xlu0 %179
  %v181 = vsel %vm78, %v48, 0.0
  %182 = vadd.xlane.f32.xlu0 %v181
  %v183 = vpop.xlane.xlu0 %182
  %v184 = vsel %vm78, %v49, 0.0
  %185 = vadd.xlane.f32.xlu0 %v184
  %v186 = vpop.xlane.xlu0 %185
  %v187 = vsel %vm78, %v50, 0.0
  %188 = vadd.xlane.f32.xlu0 %v187
  %v189 = vpop.xlane.xlu0 %188
  %v190 = vsel %vm78, %v51, 0.0
  %191 = vadd.xlane.f32.xlu0 %v190
  %v192 = vpop.xlane.xlu0 %191
  %v193 = vsel %vm78, %v52, 0.0
  %194 = vadd.xlane.f32.xlu0 %v193
  %v195 = vpop.xlane.xlu0 %194
  %v196 = vsel %vm78, %v53, 0.0
  %197 = vadd.xlane.f32.xlu0 %v196
  %v198 = vpop.xlane.xlu0 %197
  %v199 = vsel %vm78, %v54, 0.0
  %200 = vadd.xlane.f32.xlu0 %v199
  %v201 = vpop.xlane.xlu0 %200
  %v202 = vsel %vm78, %v55, 0.0
  %203 = vadd.xlane.f32.xlu0 %v202
  %v204 = vpop.xlane.xlu0 %203
  %v205 = vsel %vm78, %v56, 0.0
  %206 = vadd.xlane.f32.xlu0 %v205
  %v207 = vpop.xlane.xlu0 %206
  %v208 = vsel %vm78, %v57, 0.0
  %209 = vadd.xlane.f32.xlu0 %v208
  %v210 = vpop.xlane.xlu0 %209
  %v211 = vsel %vm78, %v58, 0.0
  %212 = vadd.xlane.f32.xlu0 %v211
  %v213 = vpop.xlane.xlu0 %212
  %v214 = vsel %vm78, %v59, 0.0
  %215 = vadd.xlane.f32.xlu0 %v214
  %v216 = vpop.xlane.xlu0 %215
  %v217 = vsel %vm78, %v60, 0.0
  %218 = vadd.xlane.f32.xlu0 %v217
  %v219 = vpop.xlane.xlu0 %218
  %v220 = vsel %vm78, %v61, 0.0
  %221 = vadd.xlane.f32.xlu0 %v220
  %v222 = vpop.xlane.xlu0 %221
  %v223 = vsel %vm78, %v62, 0.0
  %224 = vadd.xlane.f32.xlu0 %v223
  %v225 = vpop.xlane.xlu0 %224
  %v226 = vsel %vm78, %v63, 0.0
  %227 = vadd.xlane.f32.xlu0 %v226
  %v228 = vpop.xlane.xlu0 %227
  %v229 = vsel %vm78, %v64, 0.0
  %230 = vadd.xlane.f32.xlu0 %v229
  %v231 = vpop.xlane.xlu0 %230
  %v232 = vsel %vm78, %v65, 0.0
  %233 = vadd.xlane.f32.xlu0 %v232
  %v234 = vpop.xlane.xlu0 %233
  %v235 = vsel %vm78, %v66, 0.0
  %236 = vadd.xlane.f32.xlu0 %v235
  %v237 = vpop.xlane.xlu0 %236
  %v238 = vsel %vm78, %v67, 0.0
  %239 = vadd.xlane.f32.xlu0 %v238
  %v240 = vpop.xlane.xlu0 %239
  %v241 = vsel %vm78, %v68, 0.0
  %242 = vadd.xlane.f32.xlu0 %v241
  %v243 = vpop.xlane.xlu0 %242
  %v244 = vsel %vm78, %v69, 0.0
  %245 = vadd.xlane.f32.xlu0 %v244
  %v246 = vpop.xlane.xlu0 %245
  %v247 = vsel %vm78, %v70, 0.0
  %248 = vadd.xlane.f32.xlu0 %v247
  %v249 = vpop.xlane.xlu0 %248
  %v250 = vsel %vm78, %v71, 0.0
  %251 = vadd.xlane.f32.xlu0 %v250
  %v252 = vpop.xlane.xlu0 %251
  %v253 = vsel %vm78, %v72, 0.0
  %254 = vadd.xlane.f32.xlu0 %v253
  %v255 = vpop.xlane.xlu0 %254
  %v256 = vsel %vm78, %v73, 0.0
  %257 = vadd.xlane.f32.xlu0 %v256
  %v258 = vpop.xlane.xlu0 %257
  %v259 = vsel %vm78, %v74, 0.0
  %260 = vadd.xlane.f32.xlu0 %v259
  %v261 = vpop.xlane.xlu0 %260
  %v262 = vsel %vm78, %v75, 0.0
  %263 = vadd.xlane.f32.xlu0 %v262
  %v264 = vpop.xlane.xlu0 %263
  %v265 = vsel %vm78, %v76, 0.0
  %266 = vadd.xlane.f32.xlu0 %v265
  %v267 = vpop.xlane.xlu0 %266
  %v268 = vsel %vm78, %v77, 0.0
  %269 = vadd.xlane.f32.xlu0 %v268
  %v270 = vpop.xlane.xlu0 %269
  %v271 = vmul.f32 %v81, 0.25
  %v272 = vmul.f32 %v84, 0.25
  %v273 = vmul.f32 %v87, 0.25
  %v274 = vmul.f32 %v90, 0.25
  %v275 = vmul.f32 %v93, 0.25
  %v276 = vmul.f32 %v96, 0.25
  %v277 = vmul.f32 %v99, 0.25
  %v278 = vmul.f32 %v102, 0.25
  %v279 = vmul.f32 %v105, 0.25
  %v280 = vmul.f32 %v108, 0.25
  %v281 = vmul.f32 %v111, 0.25
  %v282 = vmul.f32 %v114, 0.25
  %v283 = vmul.f32 %v117, 0.25
  %v284 = vmul.f32 %v120, 0.25
  %v285 = vmul.f32 %v123, 0.25
  %v286 = vmul.f32 %v126, 0.25
  %v287 = vmul.f32 %v129, 0.25
  %v288 = vmul.f32 %v132, 0.25
  %v289 = vmul.f32 %v135, 0.25
  %v290 = vmul.f32 %v138, 0.25
  %v291 = vmul.f32 %v141, 0.25
  %v292 = vmul.f32 %v144, 0.25
  %v293 = vmul.f32 %v147, 0.25
  %v294 = vmul.f32 %v150, 0.25
  %v295 = vmul.f32 %v153, 0.25
  %v296 = vmul.f32 %v156, 0.25
  %v297 = vmul.f32 %v159, 0.25
  %v298 = vmul.f32 %v162, 0.25
  %v299 = vmul.f32 %v165, 0.25
  %v300 = vmul.f32 %v168, 0.25
  %v301 = vmul.f32 %v171, 0.25
  %v302 = vmul.f32 %v174, 0.25
  %v303 = vmul.f32 %v177, 0.25
  %v304 = vmul.f32 %v180, 0.25
  %v305 = vmul.f32 %v183, 0.25
  %v306 = vmul.f32 %v186, 0.25
  %v307 = vmul.f32 %v189, 0.25
  %v308 = vmul.f32 %v192, 0.25
  %v309 = vmul.f32 %v195, 0.25
  %v310 = vmul.f32 %v198, 0.25
  %v311 = vmul.f32 %v201, 0.25
  %v312 = vmul.f32 %v204, 0.25
  %v313 = vmul.f32 %v207, 0.25
  %v314 = vmul.f32 %v210, 0.25
  %v315 = vmul.f32 %v213, 0.25
  %v316 = vmul.f32 %v216, 0.25
  %v317 = vmul.f32 %v219, 0.25
  %v318 = vmul.f32 %v222, 0.25
  %v319 = vmul.f32 %v225, 0.25
  %v320 = vmul.f32 %v228, 0.25
  %v321 = vmul.f32 %v231, 0.25
  %v322 = vmul.f32 %v234, 0.25
  %v323 = vmul.f32 %v237, 0.25
  %v324 = vmul.f32 %v240, 0.25
  %v325 = vmul.f32 %v243, 0.25
  %v326 = vmul.f32 %v246, 0.25
  %v327 = vmul.f32 %v249, 0.25
  %v328 = vmul.f32 %v252, 0.25
  %v329 = vmul.f32 %v255, 0.25
  %v330 = vmul.f32 %v258, 0.25
  %v331 = vmul.f32 %v261, 0.25
  %v332 = vmul.f32 %v264, 0.25
  %v333 = vmul.f32 %v267, 0.25
  %v334 = vmul.f32 %v270, 0.25
  %v335 = vsub.f32 %v14, %v271
  %v336 = vsub.f32 %v15, %v272
  %v337 = vsub.f32 %v16, %v273
  %v338 = vsub.f32 %v17, %v274
  %v339 = vsub.f32 %v18, %v275
  %v340 = vsub.f32 %v19, %v276
  %v341 = vsub.f32 %v20, %v277
  %v342 = vsub.f32 %v21, %v278
  %v343 = vsub.f32 %v22, %v279
  %v344 = vsub.f32 %v23, %v280
  %v345 = vsub.f32 %v24, %v281
  %v346 = vsub.f32 %v25, %v282
  %v347 = vsub.f32 %v26, %v283
  %v348 = vsub.f32 %v27, %v284
  %v349 = vsub.f32 %v28, %v285
  %v350 = vsub.f32 %v29, %v286
  %v351 = vsub.f32 %v30, %v287
  %v352 = vsub.f32 %v31, %v288
  %v353 = vsub.f32 %v32, %v289
  %v354 = vsub.f32 %v33, %v290
  %v355 = vsub.f32 %v34, %v291
  %v356 = vsub.f32 %v35, %v292
  %v357 = vsub.f32 %v36, %v293
  %v358 = vsub.f32 %v37, %v294
  %v359 = vsub.f32 %v38, %v295
  %v360 = vsub.f32 %v39, %v296
  %v361 = vsub.f32 %v40, %v297
  %v362 = vsub.f32 %v41, %v298
  %v363 = vsub.f32 %v42, %v299
  %v364 = vsub.f32 %v43, %v300
  %v365 = vsub.f32 %v44, %v301
  %v366 = vsub.f32 %v45, %v302
  %v367 = vsub.f32 %v46, %v303
  %v368 = vsub.f32 %v47, %v304
  %v369 = vsub.f32 %v48, %v305
  %v370 = vsub.f32 %v49, %v306
  %v371 = vsub.f32 %v50, %v307
  %v372 = vsub.f32 %v51, %v308
  %v373 = vsub.f32 %v52, %v309
  %v374 = vsub.f32 %v53, %v310
  %v375 = vsub.f32 %v54, %v311
  %v376 = vsub.f32 %v55, %v312
  %v377 = vsub.f32 %v56, %v313
  %v378 = vsub.f32 %v57, %v314
  %v379 = vsub.f32 %v58, %v315
  %v380 = vsub.f32 %v59, %v316
  %v381 = vsub.f32 %v60, %v317
  %v382 = vsub.f32 %v61, %v318
  %v383 = vsub.f32 %v62, %v319
  %v384 = vsub.f32 %v63, %v320
  %v385 = vsub.f32 %v64, %v321
  %v386 = vsub.f32 %v65, %v322
  %v387 = vsub.f32 %v66, %v323
  %v388 = vsub.f32 %v67, %v324
  %v389 = vsub.f32 %v68, %v325
  %v390 = vsub.f32 %v69, %v326
  %v391 = vsub.f32 %v70, %v327
  %v392 = vsub.f32 %v71, %v328
  %v393 = vsub.f32 %v72, %v329
  %v394 = vsub.f32 %v73, %v330
  %v395 = vsub.f32 %v74, %v331
  %v396 = vsub.f32 %v75, %v332
  %v397 = vsub.f32 %v76, %v333
  %v398 = vsub.f32 %v77, %v334
  %v399 = vmul.f32 %v335, %v335
  %v400 = vmul.f32 %v336, %v336
  %v401 = vmul.f32 %v337, %v337
  %v402 = vmul.f32 %v338, %v338
  %v403 = vmul.f32 %v339, %v339
  %v404 = vmul.f32 %v340, %v340
  %v405 = vmul.f32 %v341, %v341
  %v406 = vmul.f32 %v342, %v342
  %v407 = vmul.f32 %v343, %v343
  %v408 = vmul.f32 %v344, %v344
  %v409 = vmul.f32 %v345, %v345
  %v410 = vmul.f32 %v346, %v346
  %v411 = vmul.f32 %v347, %v347
  %v412 = vmul.f32 %v348, %v348
  %v413 = vmul.f32 %v349, %v349
  %v414 = vmul.f32 %v350, %v350
  %v415 = vmul.f32 %v351, %v351
  %v416 = vmul.f32 %v352, %v352
  %v417 = vmul.f32 %v353, %v353
  %v418 = vmul.f32 %v354, %v354
  %v419 = vmul.f32 %v355, %v355
  %v420 = vmul.f32 %v356, %v356
  %v421 = vmul.f32 %v357, %v357
  %v422 = vmul.f32 %v358, %v358
  %v423 = vmul.f32 %v359, %v359
  %v424 = vmul.f32 %v360, %v360
  %v425 = vmul.f32 %v361, %v361
  %v426 = vmul.f32 %v362, %v362
  %v427 = vmul.f32 %v363, %v363
  %v428 = vmul.f32 %v364, %v364
  %v429 = vmul.f32 %v365, %v365
  %v430 = vmul.f32 %v366, %v366
  %v431 = vmul.f32 %v367, %v367
  %v432 = vmul.f32 %v368, %v368
  %v433 = vmul.f32 %v369, %v369
  %v434 = vmul.f32 %v370, %v370
  %v435 = vmul.f32 %v371, %v371
  %v436 = vmul.f32 %v372, %v372
  %v437 = vmul.f32 %v373, %v373
  %v438 = vmul.f32 %v374, %v374
  %v439 = vmul.f32 %v375, %v375
  %v440 = vmul.f32 %v376, %v376
  %v441 = vmul.f32 %v377, %v377
  %v442 = vmul.f32 %v378, %v378
  %v443 = vmul.f32 %v379, %v379
  %v444 = vmul.f32 %v380, %v380
  %v445 = vmul.f32 %v381, %v381
  %v446 = vmul.f32 %v382, %v382
  %v447 = vmul.f32 %v383, %v383
  %v448 = vmul.f32 %v384, %v384
  %v449 = vmul.f32 %v385, %v385
  %v450 = vmul.f32 %v386, %v386
  %v451 = vmul.f32 %v387, %v387
  %v452 = vmul.f32 %v388, %v388
  %v453 = vmul.f32 %v389, %v389
  %v454 = vmul.f32 %v390, %v390
  %v455 = vmul.f32 %v391, %v391
  %v456 = vmul.f32 %v392, %v392
  %v457 = vmul.f32 %v393, %v393
  %v458 = vmul.f32 %v394, %v394
  %v459 = vmul.f32 %v395, %v395
  %v460 = vmul.f32 %v396, %v396
  %v461 = vmul.f32 %v397, %v397
  %v462 = vmul.f32 %v398, %v398
  %v463 = vsel %vm78, %v399, 0.0
  %464 = vadd.xlane.f32.xlu0 %v463
  %v465 = vpop.xlane.xlu0 %464
  %v466 = vsel %vm78, %v400, 0.0
  %467 = vadd.xlane.f32.xlu0 %v466
  %v468 = vpop.xlane.xlu0 %467
  %v469 = vsel %vm78, %v401, 0.0
  %470 = vadd.xlane.f32.xlu0 %v469
  %v471 = vpop.xlane.xlu0 %470
  %v472 = vsel %vm78, %v402, 0.0
  %473 = vadd.xlane.f32.xlu0 %v472
  %v474 = vpop.xlane.xlu0 %473
  %v475 = vsel %vm78, %v403, 0.0
  %476 = vadd.xlane.f32.xlu0 %v475
  %v477 = vpop.xlane.xlu0 %476
  %v478 = vsel %vm78, %v404, 0.0
  %479 = vadd.xlane.f32.xlu0 %v478
  %v480 = vpop.xlane.xlu0 %479
  %v481 = vsel %vm78, %v405, 0.0
  %482 = vadd.xlane.f32.xlu0 %v481
  %v483 = vpop.xlane.xlu0 %482
  %v484 = vsel %vm78, %v406, 0.0
  %485 = vadd.xlane.f32.xlu0 %v484
  %v486 = vpop.xlane.xlu0 %485
  %v487 = vsel %vm78, %v407, 0.0
  %488 = vadd.xlane.f32.xlu0 %v487
  %v489 = vpop.xlane.xlu0 %488
  %v490 = vsel %vm78, %v408, 0.0
  %491 = vadd.xlane.f32.xlu0 %v490
  %v492 = vpop.xlane.xlu0 %491
  %v493 = vsel %vm78, %v409, 0.0
  %494 = vadd.xlane.f32.xlu0 %v493
  %v495 = vpop.xlane.xlu0 %494
  %v496 = vsel %vm78, %v410, 0.0
  %497 = vadd.xlane.f32.xlu0 %v496
  %v498 = vpop.xlane.xlu0 %497
  %v499 = vsel %vm78, %v411, 0.0
  %500 = vadd.xlane.f32.xlu0 %v499
  %v501 = vpop.xlane.xlu0 %500
  %v502 = vsel %vm78, %v412, 0.0
  %503 = vadd.xlane.f32.xlu0 %v502
  %v504 = vpop.xlane.xlu0 %503
  %v505 = vsel %vm78, %v413, 0.0
  %506 = vadd.xlane.f32.xlu0 %v505
  %v507 = vpop.xlane.xlu0 %506
  %v508 = vsel %vm78, %v414, 0.0
  %509 = vadd.xlane.f32.xlu0 %v508
  %v510 = vpop.xlane.xlu0 %509
  %v511 = vsel %vm78, %v415, 0.0
  %512 = vadd.xlane.f32.xlu0 %v511
  %v513 = vpop.xlane.xlu0 %512
  %v514 = vsel %vm78, %v416, 0.0
  %515 = vadd.xlane.f32.xlu0 %v514
  %v516 = vpop.xlane.xlu0 %515
  %v517 = vsel %vm78, %v417, 0.0
  %518 = vadd.xlane.f32.xlu0 %v517
  %v519 = vpop.xlane.xlu0 %518
  %v520 = vsel %vm78, %v418, 0.0
  %521 = vadd.xlane.f32.xlu0 %v520
  %v522 = vpop.xlane.xlu0 %521
  %v523 = vsel %vm78, %v419, 0.0
  %524 = vadd.xlane.f32.xlu0 %v523
  %v525 = vpop.xlane.xlu0 %524
  %v526 = vsel %vm78, %v420, 0.0
  %527 = vadd.xlane.f32.xlu0 %v526
  %v528 = vpop.xlane.xlu0 %527
  %v529 = vsel %vm78, %v421, 0.0
  %530 = vadd.xlane.f32.xlu0 %v529
  %v531 = vpop.xlane.xlu0 %530
  %v532 = vsel %vm78, %v422, 0.0
  %533 = vadd.xlane.f32.xlu0 %v532
  %v534 = vpop.xlane.xlu0 %533
  %v535 = vsel %vm78, %v423, 0.0
  %536 = vadd.xlane.f32.xlu0 %v535
  %v537 = vpop.xlane.xlu0 %536
  %v538 = vsel %vm78, %v424, 0.0
  %539 = vadd.xlane.f32.xlu0 %v538
  %v540 = vpop.xlane.xlu0 %539
  %v541 = vsel %vm78, %v425, 0.0
  %542 = vadd.xlane.f32.xlu0 %v541
  %v543 = vpop.xlane.xlu0 %542
  %v544 = vsel %vm78, %v426, 0.0
  %545 = vadd.xlane.f32.xlu0 %v544
  %v546 = vpop.xlane.xlu0 %545
  %v547 = vsel %vm78, %v427, 0.0
  %548 = vadd.xlane.f32.xlu0 %v547
  %v549 = vpop.xlane.xlu0 %548
  %v550 = vsel %vm78, %v428, 0.0
  %551 = vadd.xlane.f32.xlu0 %v550
  %v552 = vpop.xlane.xlu0 %551
  %v553 = vsel %vm78, %v429, 0.0
  %554 = vadd.xlane.f32.xlu0 %v553
  %v555 = vpop.xlane.xlu0 %554
  %v556 = vsel %vm78, %v430, 0.0
  %557 = vadd.xlane.f32.xlu0 %v556
  %v558 = vpop.xlane.xlu0 %557
  %v559 = vsel %vm78, %v431, 0.0
  %560 = vadd.xlane.f32.xlu0 %v559
  %v561 = vpop.xlane.xlu0 %560
  %v562 = vsel %vm78, %v432, 0.0
  %563 = vadd.xlane.f32.xlu0 %v562
  %v564 = vpop.xlane.xlu0 %563
  %v565 = vsel %vm78, %v433, 0.0
  %566 = vadd.xlane.f32.xlu0 %v565
  %v567 = vpop.xlane.xlu0 %566
  %v568 = vsel %vm78, %v434, 0.0
  %569 = vadd.xlane.f32.xlu0 %v568
  %v570 = vpop.xlane.xlu0 %569
  %v571 = vsel %vm78, %v435, 0.0
  %572 = vadd.xlane.f32.xlu0 %v571
  %v573 = vpop.xlane.xlu0 %572
  %v574 = vsel %vm78, %v436, 0.0
  %575 = vadd.xlane.f32.xlu0 %v574
  %v576 = vpop.xlane.xlu0 %575
  %v577 = vsel %vm78, %v437, 0.0
  %578 = vadd.xlane.f32.xlu0 %v577
  %v579 = vpop.xlane.xlu0 %578
  %v580 = vsel %vm78, %v438, 0.0
  %581 = vadd.xlane.f32.xlu0 %v580
  %v582 = vpop.xlane.xlu0 %581
  %v583 = vsel %vm78, %v439, 0.0
  %584 = vadd.xlane.f32.xlu0 %v583
  %v585 = vpop.xlane.xlu0 %584
  %v586 = vsel %vm78, %v440, 0.0
  %587 = vadd.xlane.f32.xlu0 %v586
  %v588 = vpop.xlane.xlu0 %587
  %v589 = vsel %vm78, %v441, 0.0
  %590 = vadd.xlane.f32.xlu0 %v589
  %v591 = vpop.xlane.xlu0 %590
  %v592 = vsel %vm78, %v442, 0.0
  %593 = vadd.xlane.f32.xlu0 %v592
  %v594 = vpop.xlane.xlu0 %593
  %v595 = vsel %vm78, %v443, 0.0
  %596 = vadd.xlane.f32.xlu0 %v595
  %v597 = vpop.xlane.xlu0 %596
  %v598 = vsel %vm78, %v444, 0.0
  %599 = vadd.xlane.f32.xlu0 %v598
  %v600 = vpop.xlane.xlu0 %599
  %v601 = vsel %vm78, %v445, 0.0
  %602 = vadd.xlane.f32.xlu0 %v601
  %v603 = vpop.xlane.xlu0 %602
  %v604 = vsel %vm78, %v446, 0.0
  %605 = vadd.xlane.f32.xlu0 %v604
  %v606 = vpop.xlane.xlu0 %605
  %v607 = vsel %vm78, %v447, 0.0
  %608 = vadd.xlane.f32.xlu0 %v607
  %v609 = vpop.xlane.xlu0 %608
  %v610 = vsel %vm78, %v448, 0.0
  %611 = vadd.xlane.f32.xlu0 %v610
  %v612 = vpop.xlane.xlu0 %611
  %v613 = vsel %vm78, %v449, 0.0
  %614 = vadd.xlane.f32.xlu0 %v613
  %v615 = vpop.xlane.xlu0 %614
  %v616 = vsel %vm78, %v450, 0.0
  %617 = vadd.xlane.f32.xlu0 %v616
  %v618 = vpop.xlane.xlu0 %617
  %v619 = vsel %vm78, %v451, 0.0
  %620 = vadd.xlane.f32.xlu0 %v619
  %v621 = vpop.xlane.xlu0 %620
  %v622 = vsel %vm78, %v452, 0.0
  %623 = vadd.xlane.f32.xlu0 %v622
  %v624 = vpop.xlane.xlu0 %623
  %v625 = vsel %vm78, %v453, 0.0
  %626 = vadd.xlane.f32.xlu0 %v625
  %v627 = vpop.xlane.xlu0 %626
  %v628 = vsel %vm78, %v454, 0.0
  %629 = vadd.xlane.f32.xlu0 %v628
  %v630 = vpop.xlane.xlu0 %629
  %v631 = vsel %vm78, %v455, 0.0
  %632 = vadd.xlane.f32.xlu0 %v631
  %v633 = vpop.xlane.xlu0 %632
  %v634 = vsel %vm78, %v456, 0.0
  %635 = vadd.xlane.f32.xlu0 %v634
  %v636 = vpop.xlane.xlu0 %635
  %v637 = vsel %vm78, %v457, 0.0
  %638 = vadd.xlane.f32.xlu0 %v637
  %v639 = vpop.xlane.xlu0 %638
  %v640 = vsel %vm78, %v458, 0.0
  %641 = vadd.xlane.f32.xlu0 %v640
  %v642 = vpop.xlane.xlu0 %641
  %v643 = vsel %vm78, %v459, 0.0
  %644 = vadd.xlane.f32.xlu0 %v643
  %v645 = vpop.xlane.xlu0 %644
  %v646 = vsel %vm78, %v460, 0.0
  %647 = vadd.xlane.f32.xlu0 %v646
  %v648 = vpop.xlane.xlu0 %647
  %v649 = vsel %vm78, %v461, 0.0
  %650 = vadd.xlane.f32.xlu0 %v649
  %v651 = vpop.xlane.xlu0 %650
  %v652 = vsel %vm78, %v462, 0.0
  %653 = vadd.xlane.f32.xlu0 %v652
  %v654 = vpop.xlane.xlu0 %653
  %v655 = vmul.f32 %v465, 0.25
  %v656 = vmul.f32 %v468, 0.25
  %v657 = vmul.f32 %v471, 0.25
  %v658 = vmul.f32 %v474, 0.25
  %v659 = vmul.f32 %v477, 0.25
  %v660 = vmul.f32 %v480, 0.25
  %v661 = vmul.f32 %v483, 0.25
  %v662 = vmul.f32 %v486, 0.25
  %v663 = vmul.f32 %v489, 0.25
  %v664 = vmul.f32 %v492, 0.25
  %v665 = vmul.f32 %v495, 0.25
  %v666 = vmul.f32 %v498, 0.25
  %v667 = vmul.f32 %v501, 0.25
  %v668 = vmul.f32 %v504, 0.25
  %v669 = vmul.f32 %v507, 0.25
  %v670 = vmul.f32 %v510, 0.25
  %v671 = vmul.f32 %v513, 0.25
  %v672 = vmul.f32 %v516, 0.25
  %v673 = vmul.f32 %v519, 0.25
  %v674 = vmul.f32 %v522, 0.25
  %v675 = vmul.f32 %v525, 0.25
  %v676 = vmul.f32 %v528, 0.25
  %v677 = vmul.f32 %v531, 0.25
  %v678 = vmul.f32 %v534, 0.25
  %v679 = vmul.f32 %v537, 0.25
  %v680 = vmul.f32 %v540, 0.25
  %v681 = vmul.f32 %v543, 0.25
  %v682 = vmul.f32 %v546, 0.25
  %v683 = vmul.f32 %v549, 0.25
  %v684 = vmul.f32 %v552, 0.25
  %v685 = vmul.f32 %v555, 0.25
  %v686 = vmul.f32 %v558, 0.25
  %v687 = vmul.f32 %v561, 0.25
  %v688 = vmul.f32 %v564, 0.25
  %v689 = vmul.f32 %v567, 0.25
  %v690 = vmul.f32 %v570, 0.25
  %v691 = vmul.f32 %v573, 0.25
  %v692 = vmul.f32 %v576, 0.25
  %v693 = vmul.f32 %v579, 0.25
  %v694 = vmul.f32 %v582, 0.25
  %v695 = vmul.f32 %v585, 0.25
  %v696 = vmul.f32 %v588, 0.25
  %v697 = vmul.f32 %v591, 0.25
  %v698 = vmul.f32 %v594, 0.25
  %v699 = vmul.f32 %v597, 0.25
  %v700 = vmul.f32 %v600, 0.25
  %v701 = vmul.f32 %v603, 0.25
  %v702 = vmul.f32 %v606, 0.25
  %v703 = vmul.f32 %v609, 0.25
  %v704 = vmul.f32 %v612, 0.25
  %v705 = vmul.f32 %v615, 0.25
  %v706 = vmul.f32 %v618, 0.25
  %v707 = vmul.f32 %v621, 0.25
  %v708 = vmul.f32 %v624, 0.25
  %v709 = vmul.f32 %v627, 0.25
  %v710 = vmul.f32 %v630, 0.25
  %v711 = vmul.f32 %v633, 0.25
  %v712 = vmul.f32 %v636, 0.25
  %v713 = vmul.f32 %v639, 0.25
  %v714 = vmul.f32 %v642, 0.25
  %v715 = vmul.f32 %v645, 0.25
  %v716 = vmul.f32 %v648, 0.25
  %v717 = vmul.f32 %v651, 0.25
  %v718 = vmul.f32 %v654, 0.25
  %v719 = vadd.f32 %v655, 1e-06
  %v720 = vadd.f32 %v656, 1e-06
  %v721 = vadd.f32 %v657, 1e-06
  %v722 = vadd.f32 %v658, 1e-06
  %v723 = vadd.f32 %v659, 1e-06
  %v724 = vadd.f32 %v660, 1e-06
  %v725 = vadd.f32 %v661, 1e-06
  %v726 = vadd.f32 %v662, 1e-06
  %v727 = vadd.f32 %v663, 1e-06
  %v728 = vadd.f32 %v664, 1e-06
  %v729 = vadd.f32 %v665, 1e-06
  %v730 = vadd.f32 %v666, 1e-06
  %v731 = vadd.f32 %v667, 1e-06
  %v732 = vadd.f32 %v668, 1e-06
  %v733 = vadd.f32 %v669, 1e-06
  %v734 = vadd.f32 %v670, 1e-06
  %v735 = vadd.f32 %v671, 1e-06
  %v736 = vadd.f32 %v672, 1e-06
  %v737 = vadd.f32 %v673, 1e-06
  %v738 = vadd.f32 %v674, 1e-06
  %v739 = vadd.f32 %v675, 1e-06
  %v740 = vadd.f32 %v676, 1e-06
  %v741 = vadd.f32 %v677, 1e-06
  %v742 = vadd.f32 %v678, 1e-06
  %v743 = vadd.f32 %v679, 1e-06
  %v744 = vadd.f32 %v680, 1e-06
  %v745 = vadd.f32 %v681, 1e-06
  %v746 = vadd.f32 %v682, 1e-06
  %v747 = vadd.f32 %v683, 1e-06
  %v748 = vadd.f32 %v684, 1e-06
  %v749 = vadd.f32 %v685, 1e-06
  %v750 = vadd.f32 %v686, 1e-06
  %v751 = vadd.f32 %v687, 1e-06
  %v752 = vadd.f32 %v688, 1e-06
  %v753 = vadd.f32 %v689, 1e-06
  %v754 = vadd.f32 %v690, 1e-06
  %v755 = vadd.f32 %v691, 1e-06
  %v756 = vadd.f32 %v692, 1e-06
  %v757 = vadd.f32 %v693, 1e-06
  %v758 = vadd.f32 %v694, 1e-06
  %v759 = vadd.f32 %v695, 1e-06
  %v760 = vadd.f32 %v696, 1e-06
  %v761 = vadd.f32 %v697, 1e-06
  %v762 = vadd.f32 %v698, 1e-06
  %v763 = vadd.f32 %v699, 1e-06
  %v764 = vadd.f32 %v700, 1e-06
  %v765 = vadd.f32 %v701, 1e-06
  %v766 = vadd.f32 %v702, 1e-06
  %v767 = vadd.f32 %v703, 1e-06
  %v768 = vadd.f32 %v704, 1e-06
  %v769 = vadd.f32 %v705, 1e-06
  %v770 = vadd.f32 %v706, 1e-06
  %v771 = vadd.f32 %v707, 1e-06
  %v772 = vadd.f32 %v708, 1e-06
  %v773 = vadd.f32 %v709, 1e-06
  %v774 = vadd.f32 %v710, 1e-06
  %v775 = vadd.f32 %v711, 1e-06
  %v776 = vadd.f32 %v712, 1e-06
  %v777 = vadd.f32 %v713, 1e-06
  %v778 = vadd.f32 %v714, 1e-06
  %v779 = vadd.f32 %v715, 1e-06
  %v780 = vadd.f32 %v716, 1e-06
  %v781 = vadd.f32 %v717, 1e-06
  %v782 = vadd.f32 %v718, 1e-06
  %v783 = vrsqrt.pop %v719
  %v784 = vrsqrt.pop %v720
  %v785 = vrsqrt.pop %v721
  %v786 = vrsqrt.pop %v722
  %v787 = vrsqrt.pop %v723
  %v788 = vrsqrt.pop %v724
  %v789 = vrsqrt.pop %v725
  %v790 = vrsqrt.pop %v726
  %v791 = vrsqrt.pop %v727
  %v792 = vrsqrt.pop %v728
  %v793 = vrsqrt.pop %v729
  %v794 = vrsqrt.pop %v730
  %v795 = vrsqrt.pop %v731
  %v796 = vrsqrt.pop %v732
  %v797 = vrsqrt.pop %v733
  %v798 = vrsqrt.pop %v734
  %v799 = vrsqrt.pop %v735
  %v800 = vrsqrt.pop %v736
  %v801 = vrsqrt.pop %v737
  %v802 = vrsqrt.pop %v738
  %v803 = vrsqrt.pop %v739
  %v804 = vrsqrt.pop %v740
  %v805 = vrsqrt.pop %v741
  %v806 = vrsqrt.pop %v742
  %v807 = vrsqrt.pop %v743
  %v808 = vrsqrt.pop %v744
  %v809 = vrsqrt.pop %v745
  %v810 = vrsqrt.pop %v746
  %v811 = vrsqrt.pop %v747
  %v812 = vrsqrt.pop %v748
  %v813 = vrsqrt.pop %v749
  %v814 = vrsqrt.pop %v750
  %v815 = vrsqrt.pop %v751
  %v816 = vrsqrt.pop %v752
  %v817 = vrsqrt.pop %v753
  %v818 = vrsqrt.pop %v754
  %v819 = vrsqrt.pop %v755
  %v820 = vrsqrt.pop %v756
  %v821 = vrsqrt.pop %v757
  %v822 = vrsqrt.pop %v758
  %v823 = vrsqrt.pop %v759
  %v824 = vrsqrt.pop %v760
  %v825 = vrsqrt.pop %v761
  %v826 = vrsqrt.pop %v762
  %v827 = vrsqrt.pop %v763
  %v828 = vrsqrt.pop %v764
  %v829 = vrsqrt.pop %v765
  %v830 = vrsqrt.pop %v766
  %v831 = vrsqrt.pop %v767
  %v832 = vrsqrt.pop %v768
  %v833 = vrsqrt.pop %v769
  %v834 = vrsqrt.pop %v770
  %v835 = vrsqrt.pop %v771
  %v836 = vrsqrt.pop %v772
  %v837 = vrsqrt.pop %v773
  %v838 = vrsqrt.pop %v774
  %v839 = vrsqrt.pop %v775
  %v840 = vrsqrt.pop %v776
  %v841 = vrsqrt.pop %v777
  %v842 = vrsqrt.pop %v778
  %v843 = vrsqrt.pop %v779
  %v844 = vrsqrt.pop %v780
  %v845 = vrsqrt.pop %v781
  %v846 = vrsqrt.pop %v782
  %v847 = vld [vmem:[%s1] sm:$0x1]
  %v848 = vld [vmem:[%s2] sm:$0x1]
  %v849 = vmul.f32 %v335, %v783
  %v850 = vmul.f32 %v336, %v784
  %v851 = vmul.f32 %v337, %v785
  %v852 = vmul.f32 %v338, %v786
  %v853 = vmul.f32 %v339, %v787
  %v854 = vmul.f32 %v340, %v788
  %v855 = vmul.f32 %v341, %v789
  %v856 = vmul.f32 %v342, %v790
  %v857 = vmul.f32 %v343, %v791
  %v858 = vmul.f32 %v344, %v792
  %v859 = vmul.f32 %v345, %v793
  %v860 = vmul.f32 %v346, %v794
  %v861 = vmul.f32 %v347, %v795
  %v862 = vmul.f32 %v348, %v796
  %v863 = vmul.f32 %v349, %v797
  %v864 = vmul.f32 %v350, %v798
  %v865 = vmul.f32 %v351, %v799
  %v866 = vmul.f32 %v352, %v800
  %v867 = vmul.f32 %v353, %v801
  %v868 = vmul.f32 %v354, %v802
  %v869 = vmul.f32 %v355, %v803
  %v870 = vmul.f32 %v356, %v804
  %v871 = vmul.f32 %v357, %v805
  %v872 = vmul.f32 %v358, %v806
  %v873 = vmul.f32 %v359, %v807
  %v874 = vmul.f32 %v360, %v808
  %v875 = vmul.f32 %v361, %v809
  %v876 = vmul.f32 %v362, %v810
  %v877 = vmul.f32 %v363, %v811
  %v878 = vmul.f32 %v364, %v812
  %v879 = vmul.f32 %v365, %v813
  %v880 = vmul.f32 %v366, %v814
  %v881 = vmul.f32 %v367, %v815
  %v882 = vmul.f32 %v368, %v816
  %v883 = vmul.f32 %v369, %v817
  %v884 = vmul.f32 %v370, %v818
  %v885 = vmul.f32 %v371, %v819
  %v886 = vmul.f32 %v372, %v820
  %v887 = vmul.f32 %v373, %v821
  %v888 = vmul.f32 %v374, %v822
  %v889 = vmul.f32 %v375, %v823
  %v890 = vmul.f32 %v376, %v824
  %v891 = vmul.f32 %v377, %v825
  %v892 = vmul.f32 %v378, %v826
  %v893 = vmul.f32 %v379, %v827
  %v894 = vmul.f32 %v380, %v828
  %v895 = vmul.f32 %v381, %v829
  %v896 = vmul.f32 %v382, %v830
  %v897 = vmul.f32 %v383, %v831
  %v898 = vmul.f32 %v384, %v832
  %v899 = vmul.f32 %v385, %v833
  %v900 = vmul.f32 %v386, %v834
  %v901 = vmul.f32 %v387, %v835
  %v902 = vmul.f32 %v388, %v836
  %v903 = vmul.f32 %v389, %v837
  %v904 = vmul.f32 %v390, %v838
  %v905 = vmul.f32 %v391, %v839
  %v906 = vmul.f32 %v392, %v840
  %v907 = vmul.f32 %v393, %v841
  %v908 = vmul.f32 %v394, %v842
  %v909 = vmul.f32 %v395, %v843
  %v910 = vmul.f32 %v396, %v844
  %v911 = vmul.f32 %v397, %v845
  %v912 = vmul.f32 %v398, %v846
  %v914 = vlaneseq
  %v915 = vshrl.u32 %v914, 7
  %v916 = vsub.s32 0, %v915
  %v917 = vrot.slane %v847, %v916
  %v919 = vmul.f32 %v849, %v917
  %v920 = vmul.f32 %v850, %v917
  %v921 = vmul.f32 %v851, %v917
  %v922 = vmul.f32 %v852, %v917
  %v923 = vmul.f32 %v853, %v917
  %v924 = vmul.f32 %v854, %v917
  %v925 = vmul.f32 %v855, %v917
  %v926 = vmul.f32 %v856, %v917
  %v927 = vmul.f32 %v857, %v917
  %v928 = vmul.f32 %v858, %v917
  %v929 = vmul.f32 %v859, %v917
  %v930 = vmul.f32 %v860, %v917
  %v931 = vmul.f32 %v861, %v917
  %v932 = vmul.f32 %v862, %v917
  %v933 = vmul.f32 %v863, %v917
  %v934 = vmul.f32 %v864, %v917
  %v935 = vmul.f32 %v865, %v917
  %v936 = vmul.f32 %v866, %v917
  %v937 = vmul.f32 %v867, %v917
  %v938 = vmul.f32 %v868, %v917
  %v939 = vmul.f32 %v869, %v917
  %v940 = vmul.f32 %v870, %v917
  %v941 = vmul.f32 %v871, %v917
  %v942 = vmul.f32 %v872, %v917
  %v943 = vmul.f32 %v873, %v917
  %v944 = vmul.f32 %v874, %v917
  %v945 = vmul.f32 %v875, %v917
  %v946 = vmul.f32 %v876, %v917
  %v947 = vmul.f32 %v877, %v917
  %v948 = vmul.f32 %v878, %v917
  %v949 = vmul.f32 %v879, %v917
  %v950 = vmul.f32 %v880, %v917
  %v951 = vmul.f32 %v881, %v917
  %v952 = vmul.f32 %v882, %v917
  %v953 = vmul.f32 %v883, %v917
  %v954 = vmul.f32 %v884, %v917
  %v955 = vmul.f32 %v885, %v917
  %v956 = vmul.f32 %v886, %v917
  %v957 = vmul.f32 %v887, %v917
  %v958 = vmul.f32 %v888, %v917
  %v959 = vmul.f32 %v889, %v917
  %v960 = vmul.f32 %v890, %v917
  %v961 = vmul.f32 %v891, %v917
  %v962 = vmul.f32 %v892, %v917
  %v963 = vmul.f32 %v893, %v917
  %v964 = vmul.f32 %v894, %v917
  %v965 = vmul.f32 %v895, %v917
  %v966 = vmul.f32 %v896, %v917
  %v967 = vmul.f32 %v897, %v917
  %v968 = vmul.f32 %v898, %v917
  %v969 = vmul.f32 %v899, %v917
  %v970 = vmul.f32 %v900, %v917
  %v971 = vmul.f32 %v901, %v917
  %v972 = vmul.f32 %v902, %v917
  %v973 = vmul.f32 %v903, %v917
  %v974 = vmul.f32 %v904, %v917
  %v975 = vmul.f32 %v905, %v917
  %v976 = vmul.f32 %v906, %v917
  %v977 = vmul.f32 %v907, %v917
  %v978 = vmul.f32 %v908, %v917
  %v979 = vmul.f32 %v909, %v917
  %v980 = vmul.f32 %v910, %v917
  %v981 = vmul.f32 %v911, %v917
  %v982 = vmul.f32 %v912, %v917
  %v984 = vlaneseq
  %v985 = vshrl.u32 %v984, 7
  %v986 = vsub.s32 0, %v985
  %v987 = vrot.slane %v848, %v986
  %v989 = vadd.f32 %v919, %v987
  %v990 = vadd.f32 %v920, %v987
  %v991 = vadd.f32 %v921, %v987
  %v992 = vadd.f32 %v922, %v987
  %v993 = vadd.f32 %v923, %v987
  %v994 = vadd.f32 %v924, %v987
  %v995 = vadd.f32 %v925, %v987
  %v996 = vadd.f32 %v926, %v987
  %v997 = vadd.f32 %v927, %v987
  %v998 = vadd.f32 %v928, %v987
  %v999 = vadd.f32 %v929, %v987
  %v1000 = vadd.f32 %v930, %v987
  %v1001 = vadd.f32 %v931, %v987
  %v1002 = vadd.f32 %v932, %v987
  %v1003 = vadd.f32 %v933, %v987
  %v1004 = vadd.f32 %v934, %v987
  %v1005 = vadd.f32 %v935, %v987
  %v1006 = vadd.f32 %v936, %v987
  %v1007 = vadd.f32 %v937, %v987
  %v1008 = vadd.f32 %v938, %v987
  %v1009 = vadd.f32 %v939, %v987
  %v1010 = vadd.f32 %v940, %v987
  %v1011 = vadd.f32 %v941, %v987
  %v1012 = vadd.f32 %v942, %v987
  %v1013 = vadd.f32 %v943, %v987
  %v1014 = vadd.f32 %v944, %v987
  %v1015 = vadd.f32 %v945, %v987
  %v1016 = vadd.f32 %v946, %v987
  %v1017 = vadd.f32 %v947, %v987
  %v1018 = vadd.f32 %v948, %v987
  %v1019 = vadd.f32 %v949, %v987
  %v1020 = vadd.f32 %v950, %v987
  %v1021 = vadd.f32 %v951, %v987
  %v1022 = vadd.f32 %v952, %v987
  %v1023 = vadd.f32 %v953, %v987
  %v1024 = vadd.f32 %v954, %v987
  %v1025 = vadd.f32 %v955, %v987
  %v1026 = vadd.f32 %v956, %v987
  %v1027 = vadd.f32 %v957, %v987
  %v1028 = vadd.f32 %v958, %v987
  %v1029 = vadd.f32 %v959, %v987
  %v1030 = vadd.f32 %v960, %v987
  %v1031 = vadd.f32 %v961, %v987
  %v1032 = vadd.f32 %v962, %v987
  %v1033 = vadd.f32 %v963, %v987
  %v1034 = vadd.f32 %v964, %v987
  %v1035 = vadd.f32 %v965, %v987
  %v1036 = vadd.f32 %v966, %v987
  %v1037 = vadd.f32 %v967, %v987
  %v1038 = vadd.f32 %v968, %v987
  %v1039 = vadd.f32 %v969, %v987
  %v1040 = vadd.f32 %v970, %v987
  %v1041 = vadd.f32 %v971, %v987
  %v1042 = vadd.f32 %v972, %v987
  %v1043 = vadd.f32 %v973, %v987
  %v1044 = vadd.f32 %v974, %v987
  %v1045 = vadd.f32 %v975, %v987
  %v1046 = vadd.f32 %v976, %v987
  %v1047 = vadd.f32 %v977, %v987
  %v1048 = vadd.f32 %v978, %v987
  %v1049 = vadd.f32 %v979, %v987
  %v1050 = vadd.f32 %v980, %v987
  %v1051 = vadd.f32 %v981, %v987
  %v1052 = vadd.f32 %v982, %v987
  %1053 = vst.msk [vmem:[%s3] sm:$0xff] %vm78, %v989
  %1054 = vst.msk [vmem:[%s3 + $0x8] sm:$0xff] %vm78, %v990
  %1055 = vst.msk [vmem:[%s3 + $0x10] sm:$0xff] %vm78, %v991
  %1056 = vst.msk [vmem:[%s3 + $0x18] sm:$0xff] %vm78, %v992
  %1057 = vst.msk [vmem:[%s3 + $0x20] sm:$0xff] %vm78, %v993
  %1058 = vst.msk [vmem:[%s3 + $0x28] sm:$0xff] %vm78, %v994
  %1059 = vst.msk [vmem:[%s3 + $0x30] sm:$0xff] %vm78, %v995
  %1060 = vst.msk [vmem:[%s3 + $0x38] sm:$0xff] %vm78, %v996
  %1061 = vst.msk [vmem:[%s3 + $0x40] sm:$0xff] %vm78, %v997
  %1062 = vst.msk [vmem:[%s3 + $0x48] sm:$0xff] %vm78, %v998
  %1063 = vst.msk [vmem:[%s3 + $0x50] sm:$0xff] %vm78, %v999
  %1064 = vst.msk [vmem:[%s3 + $0x58] sm:$0xff] %vm78, %v1000
  %1065 = vst.msk [vmem:[%s3 + $0x60] sm:$0xff] %vm78, %v1001
  %1066 = vst.msk [vmem:[%s3 + $0x68] sm:$0xff] %vm78, %v1002
  %1067 = vst.msk [vmem:[%s3 + $0x70] sm:$0xff] %vm78, %v1003
  %1068 = vst.msk [vmem:[%s3 + $0x78] sm:$0xff] %vm78, %v1004
  %1069 = vst.msk [vmem:[%s3 + $0x80] sm:$0xff] %vm78, %v1005
  %1070 = vst.msk [vmem:[%s3 + $0x88] sm:$0xff] %vm78, %v1006
  %1071 = vst.msk [vmem:[%s3 + $0x90] sm:$0xff] %vm78, %v1007
  %1072 = vst.msk [vmem:[%s3 + $0x98] sm:$0xff] %vm78, %v1008
  %1073 = vst.msk [vmem:[%s3 + $0xa0] sm:$0xff] %vm78, %v1009
  %1074 = vst.msk [vmem:[%s3 + $0xa8] sm:$0xff] %vm78, %v1010
  %1075 = vst.msk [vmem:[%s3 + $0xb0] sm:$0xff] %vm78, %v1011
  %1076 = vst.msk [vmem:[%s3 + $0xb8] sm:$0xff] %vm78, %v1012
  %1077 = vst.msk [vmem:[%s3 + $0xc0] sm:$0xff] %vm78, %v1013
  %1078 = vst.msk [vmem:[%s3 + $0xc8] sm:$0xff] %vm78, %v1014
  %1079 = vst.msk [vmem:[%s3 + $0xd0] sm:$0xff] %vm78, %v1015
  %1080 = vst.msk [vmem:[%s3 + $0xd8] sm:$0xff] %vm78, %v1016
  %1081 = vst.msk [vmem:[%s3 + $0xe0] sm:$0xff] %vm78, %v1017
  %1082 = vst.msk [vmem:[%s3 + $0xe8] sm:$0xff] %vm78, %v1018
  %1083 = vst.msk [vmem:[%s3 + $0xf0] sm:$0xff] %vm78, %v1019
  %1084 = vst.msk [vmem:[%s3 + $0xf8] sm:$0xff] %vm78, %v1020
  %1085 = vst.msk [vmem:[%s3 + $0x100] sm:$0xff] %vm78, %v1021
  %1086 = vst.msk [vmem:[%s3 + $0x108] sm:$0xff] %vm78, %v1022
  %1087 = vst.msk [vmem:[%s3 + $0x110] sm:$0xff] %vm78, %v1023
  %1088 = vst.msk [vmem:[%s3 + $0x118] sm:$0xff] %vm78, %v1024
  %1089 = vst.msk [vmem:[%s3 + $0x120] sm:$0xff] %vm78, %v1025
  %1090 = vst.msk [vmem:[%s3 + $0x128] sm:$0xff] %vm78, %v1026
  %1091 = vst.msk [vmem:[%s3 + $0x130] sm:$0xff] %vm78, %v1027
  %1092 = vst.msk [vmem:[%s3 + $0x138] sm:$0xff] %vm78, %v1028
  %1093 = vst.msk [vmem:[%s3 + $0x140] sm:$0xff] %vm78, %v1029
  %1094 = vst.msk [vmem:[%s3 + $0x148] sm:$0xff] %vm78, %v1030
  %1095 = vst.msk [vmem:[%s3 + $0x150] sm:$0xff] %vm78, %v1031
  %1096 = vst.msk [vmem:[%s3 + $0x158] sm:$0xff] %vm78, %v1032
  %1097 = vst.msk [vmem:[%s3 + $0x160] sm:$0xff] %vm78, %v1033
  %1098 = vst.msk [vmem:[%s3 + $0x168] sm:$0xff] %vm78, %v1034
  %1099 = vst.msk [vmem:[%s3 + $0x170] sm:$0xff] %vm78, %v1035
  %1100 = vst.msk [vmem:[%s3 + $0x178] sm:$0xff] %vm78, %v1036
  %1101 = vst.msk [vmem:[%s3 + $0x180] sm:$0xff] %vm78, %v1037
  %1102 = vst.msk [vmem:[%s3 + $0x188] sm:$0xff] %vm78, %v1038
  %1103 = vst.msk [vmem:[%s3 + $0x190] sm:$0xff] %vm78, %v1039
  %1104 = vst.msk [vmem:[%s3 + $0x198] sm:$0xff] %vm78, %v1040
  %1105 = vst.msk [vmem:[%s3 + $0x1a0] sm:$0xff] %vm78, %v1041
  %1106 = vst.msk [vmem:[%s3 + $0x1a8] sm:$0xff] %vm78, %v1042
  %1107 = vst.msk [vmem:[%s3 + $0x1b0] sm:$0xff] %vm78, %v1043
  %1108 = vst.msk [vmem:[%s3 + $0x1b8] sm:$0xff] %vm78, %v1044
  %1109 = vst.msk [vmem:[%s3 + $0x1c0] sm:$0xff] %vm78, %v1045
  %1110 = vst.msk [vmem:[%s3 + $0x1c8] sm:$0xff] %vm78, %v1046
  %1111 = vst.msk [vmem:[%s3 + $0x1d0] sm:$0xff] %vm78, %v1047
  %1112 = vst.msk [vmem:[%s3 + $0x1d8] sm:$0xff] %vm78, %v1048
  %1113 = vst.msk [vmem:[%s3 + $0x1e0] sm:$0xff] %vm78, %v1049
  %1114 = vst.msk [vmem:[%s3 + $0x1e8] sm:$0xff] %vm78, %v1050
  %1115 = vst.msk [vmem:[%s3 + $0x1f0] sm:$0xff] %vm78, %v1051
  %1116 = vst.msk [vmem:[%s3 + $0x1f8] sm:$0xff] %vm78, %v1052
  // Predicated region
  $region14: #{tpu_custom_call.1} parent=0 // pred_check
    _
  $region15: #{tpu_custom_call.1} parent=0 // pred_check_branch
    %1118 = sbr.rel (0) target = $region17
  $region16: #{tpu_custom_call.1} parent=0 // pred_region
    _
  $region17: #{tpu_custom_call.1} parent=0 // pred_fallthru
    _
  // Predicated region
  $region18: #{tpu_custom_call.1} parent=0 // pred_check
    _
  $region19: #{tpu_custom_call.1} parent=0 // pred_check_branch
    %1120 = sbr.rel (0) target = $region21
  $region20: #{tpu_custom_call.1} parent=0 // pred_region
    _
  $region21: #{tpu_custom_call.1} parent=0 // pred_fallthru
    _

</llo_original>
